<compile_context>
chip_gen: v7x
topology: tpu7x:2x2x1
jax: 0.10.0
libtpu: 0.0.40
codegen_flags: <defaults>
</compile_context>

<pallas_src>
import functools

import jax
import jax.numpy as jnp
from jax.experimental import pallas as pl
from jax.experimental.pallas import tpu as pltpu


def _round_up(n, m):
    return ((n + m - 1) // m) * m


def vime_kernel(x_ref, w_enc_ref, b_enc_ref, w_heads_ref, b_heads_ref,
                out_ref):
    # x: [TB, D_pad] bf16; weights bf16; biases f32; output bf16.
    x = x_ref[...]

    # backbone: Linear(D_in, Z) + ReLU (f32 accumulation on the MXU)
    h = jnp.dot(x, w_enc_ref[...],
                preferred_element_type=jnp.float32) + b_enc_ref[...]
    h = jnp.maximum(h, 0.0).astype(jnp.bfloat16)     # [TB, Z_pad]

    # fused, packed heads: [feature | mask] -> one matmul, bias, sigmoid
    y = jnp.dot(h, w_heads_ref[...],
                preferred_element_type=jnp.float32) + b_heads_ref[...]
    out_ref[...] = jax.nn.sigmoid(y).astype(out_ref.dtype)   # [TB, OUT_pad] bf16


def vime_prepare_params(w_enc, b_enc, w_feat, b_feat, w_mask, b_mask):
    """One-time padding / head fusion (hoisted out of the per-call path).

    Weights are expected in [in, out] layout, biases 1-D (out,).
    """
    d_in, z = w_enc.shape
    d_pad = _round_up(d_in, 128)                     # lane-dense feature dim
    z_pad = _round_up(z, 128)                        # lane-dense latent dim
    out_pad = _round_up(2 * d_in, 128)               # packed head columns

    w_enc_p = (jnp.zeros((d_pad, z_pad), jnp.bfloat16)
               .at[:d_in, :z].set(w_enc.astype(jnp.bfloat16)))
    b_enc_p = (jnp.zeros((1, z_pad), jnp.float32)
               .at[:, :z].set(b_enc.reshape(1, -1)))

    # Packed head weight: cols [0:d_in] = feature head, [d_in:2*d_in] = mask head.
    w_heads = jnp.zeros((z_pad, out_pad), jnp.bfloat16)
    w_heads = w_heads.at[:z, :d_in].set(w_feat.astype(jnp.bfloat16))
    w_heads = w_heads.at[:z, d_in:2 * d_in].set(w_mask.astype(jnp.bfloat16))
    b_heads = jnp.zeros((1, out_pad), jnp.float32)
    b_heads = b_heads.at[:, :d_in].set(b_feat.reshape(1, -1))
    b_heads = b_heads.at[:, d_in:2 * d_in].set(b_mask.reshape(1, -1))

    return w_enc_p, b_enc_p, w_heads, b_heads


@functools.partial(jax.jit, static_argnames=("tb",))
def vime_forward(x, w_enc_p, b_enc_p, w_heads_p, b_heads_p, tb=None):
    B, d_in = x.shape
    d_pad, z_pad = w_enc_p.shape
    out_pad = w_heads_p.shape[1]

    if tb is None:
        # Big tiles amortize the ~0.35us per-grid-step overhead, but keep
        # >= 2 grid steps so the "parallel" axis shards across v7x's 2 TCs.
        tb = max(128, min(512, _round_up(pl.cdiv(B, 2), 128)))
    b_pad = _round_up(B, tb)

    # Single fused pad + cast of the activations (no f32 padded intermediate).
    x_bf = (jnp.zeros((b_pad, d_pad), jnp.bfloat16)
            .at[:B, :d_in].set(x.astype(jnp.bfloat16)))

    grid = (b_pad // tb,)
    out = pl.pallas_call(
        vime_kernel,
        out_shape=jax.ShapeDtypeStruct((b_pad, out_pad), jnp.bfloat16),
        grid=grid,
        in_specs=[
            pl.BlockSpec((tb, d_pad), lambda i: (i, 0)),         # x tile
            pl.BlockSpec((d_pad, z_pad), lambda i: (0, 0)),      # w_enc (resident)
            pl.BlockSpec((1, z_pad), lambda i: (0, 0)),          # b_enc (resident)
            pl.BlockSpec((z_pad, out_pad), lambda i: (0, 0)),    # packed heads W
            pl.BlockSpec((1, out_pad), lambda i: (0, 0)),        # packed heads b
        ],
        out_specs=pl.BlockSpec((tb, out_pad), lambda i: (i, 0)),
        compiler_params=pltpu.CompilerParams(
            dimension_semantics=("parallel",)),
    )(x_bf, w_enc_p, b_enc_p, w_heads_p, b_heads_p)

    # Packed layout: feature head at [0:d_in], mask head at [d_in:2*d_in].
    x_pred = out[:B, :d_in].astype(jnp.float32)
    m_pred = out[:B, d_in:2 * d_in].astype(jnp.float32)
    return x_pred, m_pred


def _init_linear(key, in_f, out_f):
    # Deterministic init, roughly PyTorch nn.Linear uniform(-1/sqrt(in), +)
    kw, kb = jax.random.split(key)
    bound = 1.0 / jnp.sqrt(jnp.float32(in_f))
    w = jax.random.uniform(kw, (in_f, out_f), jnp.float32, -bound, bound)
    b = jax.random.uniform(kb, (out_f,), jnp.float32, -bound, bound)
    return w, b


if __name__ == "__main__":
    batch, input_dim, z_dim = 256, 16, 32    # tb=128 -> 2 parallel grid steps

    key = jax.random.PRNGKey(0)
    k_x, k_enc, k_feat, k_mask = jax.random.split(key, 4)

    x = jax.random.normal(k_x, (batch, input_dim), jnp.float32)
    w_enc, b_enc = _init_linear(k_enc, input_dim, z_dim)     # backbone
    w_feat, b_feat = _init_linear(k_feat, z_dim, input_dim)  # feature_model
    w_mask, b_mask = _init_linear(k_mask, z_dim, input_dim)  # mask_model

    # One-time parameter padding / head fusion (kept across calls).
    params = vime_prepare_params(w_enc, b_enc, w_feat, b_feat, w_mask, b_mask)
    params = jax.block_until_ready(params)

    x_pred, m_pred = vime_forward(x, *params)
    jax.block_until_ready((x_pred, m_pred))

    # Pure-JAX f32 reference (kernel uses bf16 operands/output -> relaxed tol).
    h_ref = jnp.maximum(x @ w_enc + b_enc, 0.0)
    x_ref_out = jax.nn.sigmoid(h_ref @ w_feat + b_feat)
    m_ref_out = jax.nn.sigmoid(h_ref @ w_mask + b_mask)
    assert x_pred.shape == (batch, input_dim)
    assert m_pred.shape == (batch, input_dim)
    assert jnp.allclose(x_pred, x_ref_out, atol=2e-2)
    assert jnp.allclose(m_pred, m_ref_out, atol=2e-2)

    print("KERNEL_OK")
</pallas_src>

<mosaic_0001>
module attributes {stable_mosaic.version = 11 : i64} {
  func.func @vime_kernel(%arg0: i32, %arg1: memref<128x128xbf16, #tpu.memory_space<vmem>>, %arg2: memref<128x128xbf16, #tpu.memory_space<vmem>>, %arg3: memref<1x128xf32, #tpu.memory_space<vmem>>, %arg4: memref<128x128xbf16, #tpu.memory_space<vmem>>, %arg5: memref<1x128xf32, #tpu.memory_space<vmem>>, %arg6: memref<128x128xbf16, #tpu.memory_space<vmem>>) attributes {dimension_semantics = [#tpu.dimension_semantics<parallel>], iteration_bounds = array<i64: 2>, scalar_prefetch = 0 : i64, scratch_operands = 0 : i64, tpu.core_type = #tpu.core_type<tc>, window_params = [{transform_indices = @transform_0, window_bounds = array<i64: 128, 128>}, {pipeline_mode = #tpu.pipeline_mode<synchronous>, transform_indices = @transform_1, window_bounds = array<i64: 128, 128>}, {pipeline_mode = #tpu.pipeline_mode<synchronous>, transform_indices = @transform_2, window_bounds = array<i64: 1, 128>}, {pipeline_mode = #tpu.pipeline_mode<synchronous>, transform_indices = @transform_3, window_bounds = array<i64: 128, 128>}, {pipeline_mode = #tpu.pipeline_mode<synchronous>, transform_indices = @transform_4, window_bounds = array<i64: 1, 128>}, {transform_indices = @transform_5, window_bounds = array<i64: 128, 128>}]} {
    %c0 = arith.constant 0 : index
    %c0_0 = arith.constant 0 : index
    %0 = vector.load %arg1[%c0, %c0_0] : memref<128x128xbf16, #tpu.memory_space<vmem>>, vector<128x128xbf16>
    %c0_1 = arith.constant 0 : index
    %c0_2 = arith.constant 0 : index
    %1 = vector.load %arg2[%c0_1, %c0_2] : memref<128x128xbf16, #tpu.memory_space<vmem>>, vector<128x128xbf16>
    %cst = arith.constant dense<0.000000e+00> : vector<128x128xf32>
    %2 = tpu.matmul %0, %1, %cst {dimension_numbers = #tpu.dot_dimension_numbers<[1], [0], [0], [1], [0, 0, 1, 1], [], []>} : vector<128x128xbf16>, vector<128x128xbf16>, vector<128x128xf32> -> vector<128x128xf32>
    %c0_3 = arith.constant 0 : index
    %c0_4 = arith.constant 0 : index
    %3 = vector.load %arg3[%c0_3, %c0_4] : memref<1x128xf32, #tpu.memory_space<vmem>>, vector<1x128xf32>
    %4 = vector.broadcast %3 : vector<1x128xf32> to vector<128x128xf32>
    %5 = arith.addf %2, %4 : vector<128x128xf32>
    %cst_5 = arith.constant 0.000000e+00 : f32
    %6 = vector.broadcast %cst_5 : f32 to vector<128x128xf32>
    %7 = arith.maximumf %5, %6 : vector<128x128xf32>
    %8 = arith.truncf %7 : vector<128x128xf32> to vector<128x128xbf16>
    %c0_6 = arith.constant 0 : index
    %c0_7 = arith.constant 0 : index
    %9 = vector.load %arg4[%c0_6, %c0_7] : memref<128x128xbf16, #tpu.memory_space<vmem>>, vector<128x128xbf16>
    %cst_8 = arith.constant dense<0.000000e+00> : vector<128x128xf32>
    %10 = tpu.matmul %8, %9, %cst_8 {dimension_numbers = #tpu.dot_dimension_numbers<[1], [0], [0], [1], [0, 0, 1, 1], [], []>} : vector<128x128xbf16>, vector<128x128xbf16>, vector<128x128xf32> -> vector<128x128xf32>
    %c0_9 = arith.constant 0 : index
    %c0_10 = arith.constant 0 : index
    %11 = vector.load %arg5[%c0_9, %c0_10] : memref<1x128xf32, #tpu.memory_space<vmem>>, vector<1x128xf32>
    %12 = vector.broadcast %11 : vector<1x128xf32> to vector<128x128xf32>
    %13 = arith.addf %10, %12 : vector<128x128xf32>
    %14 = arith.negf %13 : vector<128x128xf32>
    %15 = math.exp %14 : vector<128x128xf32>
    %cst_11 = arith.constant 1.000000e+00 : f32
    %16 = vector.broadcast %cst_11 : f32 to vector<128x128xf32>
    %17 = arith.addf %16, %15 : vector<128x128xf32>
    %18 = arith.divf %16, %17 : vector<128x128xf32>
    %19 = arith.truncf %18 : vector<128x128xf32> to vector<128x128xbf16>
    %c0_12 = arith.constant 0 : index
    %c0_13 = arith.constant 0 : index
    %20 = vector.load %arg6[%c0_12, %c0_13] : memref<128x128xbf16, #tpu.memory_space<vmem>>, vector<128x128xbf16>
    tpu.vector_store %arg6[%c0_12, %c0_13], %19 {strides = array<i32>} : memref<128x128xbf16, #tpu.memory_space<vmem>>, vector<128x128xbf16>,
    return
  }
  func.func @transform_0(%arg0: i32) -> (i32, i32) {
    %c0_i32 = arith.constant 0 : i32
    %c0_i32_0 = arith.constant 0 : i32
    return %arg0, %c0_i32 : i32, i32
  }
  func.func @transform_1(%arg0: i32) -> (i32, i32) {
    %c0_i32 = arith.constant 0 : i32
    %c0_i32_0 = arith.constant 0 : i32
    %c0_i32_1 = arith.constant 0 : i32
    return %c0_i32, %c0_i32_0 : i32, i32
  }
  func.func @transform_2(%arg0: i32) -> (i32, i32) {
    %c0_i32 = arith.constant 0 : i32
    %c0_i32_0 = arith.constant 0 : i32
    %c0_i32_1 = arith.constant 0 : i32
    return %c0_i32, %c0_i32_0 : i32, i32
  }
  func.func @transform_3(%arg0: i32) -> (i32, i32) {
    %c0_i32 = arith.constant 0 : i32
    %c0_i32_0 = arith.constant 0 : i32
    %c0_i32_1 = arith.constant 0 : i32
    return %c0_i32, %c0_i32_0 : i32, i32
  }
  func.func @transform_4(%arg0: i32) -> (i32, i32) {
    %c0_i32 = arith.constant 0 : i32
    %c0_i32_0 = arith.constant 0 : i32
    %c0_i32_1 = arith.constant 0 : i32
    return %c0_i32, %c0_i32_0 : i32, i32
  }
  func.func @transform_5(%arg0: i32) -> (i32, i32) {
    %c0_i32 = arith.constant 0 : i32
    %c0_i32_0 = arith.constant 0 : i32
    return %arg0, %c0_i32 : i32, i32
  }
}

</mosaic_0001>

<llo_original>
// kernel: vime_forward.1
$region0: #{vime_forward.1}
  #allocation0 [shape = 'u32[]', space=smem, size = 0x4, offset = 0x4, fixed_abs, tag = 'smem constant byte address 0x4 - core index']
  #allocation1 [shape = 'u32[144,128]{1,0:T(1,128)}', space=vmem, size = 0x12000, scoped, tag = 'internal scratch']
  %s0 = inlined_call_operand.vmem [shape: bf16[256,128], index: 0, kind: input, shape index: {}]
  %s1 = inlined_call_operand.vmem [shape: bf16[128,128], index: 1, kind: input, shape index: {}]
  %s2 = inlined_call_operand.vmem [shape: f32[1,128], index: 2, kind: input, shape index: {}]
  %s3 = inlined_call_operand.vmem [shape: bf16[128,128], index: 3, kind: input, shape index: {}]
  %s4 = inlined_call_operand.vmem [shape: f32[1,128], index: 4, kind: input, shape index: {}]
  %s5 = inlined_call_operand.vmem [shape: bf16[256,128], index: 5, kind: output, shape index: {}]
  %s6 = sld [smem:[#allocation0]]
  $region53: #{vime_forward.1} parent=0
    _
  %s8 = ssub.s32 1, %s6
  %s9 = scalar_select 0, %s8, %s6
  loop: start=0, step=1, limit=4
  $region2: #{vime_forward.1} parent=0 // loop_pre_header
    _
  $region3: #{vime_forward.1} parent=0 // loop_header
    %s11 = sphi 0, %s15
    %p12 = scmp.ge.s32.totalorder %s11, 4
    %s21 = sphi 0, %s23
    %s24 = sphi 0, %s21
    %s25 = sphi 0, %s24
    %s41 = sphi 0, %s25
    %s45 = sphi 0, %s45
    %s47 = sphi 0, %s45
    %s48 = sphi 0, %s47
    %s62 = sphi 0, %s48
    %s66 = sphi 0, %s66
    %s68 = sphi 0, %s66
    %s69 = sphi 0, %s68
    %s83 = sphi 0, %s69
    %s87 = sphi 0, %s87
    %s89 = sphi 0, %s87
    %s90 = sphi 0, %s89
    %s104 = sphi 0, %s90
    %s108 = sphi 0, %s108
    %s110 = sphi 0, %s108
    %s111 = sphi 0, %s110
    %s125 = sphi 0, %s111
    %s131 = sphi 0, %s133
    %s134 = sphi 0, %s131
    %s135 = sphi 0, %s134
    %s151 = sphi 0, %s135
  $region4: #{vime_forward.1} parent=0 // loop_header_branch
    %14 = sbr.rel (%p12) target = $region8
  $region5: #{vime_forward.1} parent=0 // loop_body
    %s16 = ssub.s32 %s11, 1
    %s17 = ssub.s32 %s11, 2
    %s18 = sadd.s32 %s11, 1
    %s19 = ssub.s32 %s11, %s18
    %p20 = scmp.eq.s32.totalorder %s19, 0
    %s22 = sadd.s32 %s21, 1
    %s23 = scalar_select %p20, %s21, %s22
    %p26 = pneg %p20
    %p27 = scmp.eq.s32.totalorder %s11, 1
    %p28 = por %p26, %p27
    %p29 = scmp.ne.s32.totalorder %s21, %s24
    %p30 = scmp.eq.s32.totalorder %s11, 0
    %p31 = por %p29, %p30
    %p32 = scmp.ne.s32.totalorder %s21, %s24
    %p33 = scmp.eq.s32.totalorder %s16, 1
    %p34 = por %p32, %p33
    %p35 = scmp.ne.s32.totalorder %s24, %s25
    %p36 = scmp.eq.s32.totalorder %s16, 0
    %p37 = por %p35, %p36
    %p38 = scmp.ne.s32.totalorder %s24, %s25
    %p39 = scmp.eq.s32.totalorder %s17, 1
    %p40 = por %p38, %p39
    %p42 = scmp.ne.s32.totalorder %s25, %s41
    %p43 = scmp.eq.s32.totalorder %s17, 0
    %p44 = por %p42, %p43
    %s46 = sadd.s32 %s45, 1
    %p49 = scmp.eq.s32.totalorder %s11, 1
    %p50 = scmp.ne.s32.totalorder %s45, %s47
    %p51 = scmp.eq.s32.totalorder %s11, 0
    %p52 = por %p50, %p51
    %p53 = scmp.ne.s32.totalorder %s45, %s47
    %p54 = scmp.eq.s32.totalorder %s16, 1
    %p55 = por %p53, %p54
    %p56 = scmp.ne.s32.totalorder %s47, %s48
    %p57 = scmp.eq.s32.totalorder %s16, 0
    %p58 = por %p56, %p57
    %p59 = scmp.ne.s32.totalorder %s47, %s48
    %p60 = scmp.eq.s32.totalorder %s17, 1
    %p61 = por %p59, %p60
    %p63 = scmp.ne.s32.totalorder %s48, %s62
    %p64 = scmp.eq.s32.totalorder %s17, 0
    %p65 = por %p63, %p64
    %s67 = sadd.s32 %s66, 1
    %p70 = scmp.eq.s32.totalorder %s11, 1
    %p71 = scmp.ne.s32.totalorder %s66, %s68
    %p72 = scmp.eq.s32.totalorder %s11, 0
    %p73 = por %p71, %p72
    %p74 = scmp.ne.s32.totalorder %s66, %s68
    %p75 = scmp.eq.s32.totalorder %s16, 1
    %p76 = por %p74, %p75
    %p77 = scmp.ne.s32.totalorder %s68, %s69
    %p78 = scmp.eq.s32.totalorder %s16, 0
    %p79 = por %p77, %p78
    %p80 = scmp.ne.s32.totalorder %s68, %s69
    %p81 = scmp.eq.s32.totalorder %s17, 1
    %p82 = por %p80, %p81
    %p84 = scmp.ne.s32.totalorder %s69, %s83
    %p85 = scmp.eq.s32.totalorder %s17, 0
    %p86 = por %p84, %p85
    %s88 = sadd.s32 %s87, 1
    %p91 = scmp.eq.s32.totalorder %s11, 1
    %p92 = scmp.ne.s32.totalorder %s87, %s89
    %p93 = scmp.eq.s32.totalorder %s11, 0
    %p94 = por %p92, %p93
    %p95 = scmp.ne.s32.totalorder %s87, %s89
    %p96 = scmp.eq.s32.totalorder %s16, 1
    %p97 = por %p95, %p96
    %p98 = scmp.ne.s32.totalorder %s89, %s90
    %p99 = scmp.eq.s32.totalorder %s16, 0
    %p100 = por %p98, %p99
    %p101 = scmp.ne.s32.totalorder %s89, %s90
    %p102 = scmp.eq.s32.totalorder %s17, 1
    %p103 = por %p101, %p102
    %p105 = scmp.ne.s32.totalorder %s90, %s104
    %p106 = scmp.eq.s32.totalorder %s17, 0
    %p107 = por %p105, %p106
    %s109 = sadd.s32 %s108, 1
    %p112 = scmp.eq.s32.totalorder %s11, 1
    %p113 = scmp.ne.s32.totalorder %s108, %s110
    %p114 = scmp.eq.s32.totalorder %s11, 0
    %p115 = por %p113, %p114
    %p116 = scmp.ne.s32.totalorder %s108, %s110
    %p117 = scmp.eq.s32.totalorder %s16, 1
    %p118 = por %p116, %p117
    %p119 = scmp.ne.s32.totalorder %s110, %s111
    %p120 = scmp.eq.s32.totalorder %s16, 0
    %p121 = por %p119, %p120
    %p122 = scmp.ne.s32.totalorder %s110, %s111
    %p123 = scmp.eq.s32.totalorder %s17, 1
    %p124 = por %p122, %p123
    %p126 = scmp.ne.s32.totalorder %s111, %s125
    %p127 = scmp.eq.s32.totalorder %s17, 0
    %p128 = por %p126, %p127
    %s129 = ssub.s32 %s11, %s18
    %p130 = scmp.eq.s32.totalorder %s129, 0
    %s132 = sadd.s32 %s131, 1
    %s133 = scalar_select %p130, %s131, %s132
    %p136 = pneg %p130
    %p137 = scmp.eq.s32.totalorder %s11, 1
    %p138 = por %p136, %p137
    %p139 = scmp.ne.s32.totalorder %s131, %s134
    %p140 = scmp.eq.s32.totalorder %s11, 0
    %p141 = por %p139, %p140
    %p142 = scmp.ne.s32.totalorder %s131, %s134
    %p143 = scmp.eq.s32.totalorder %s16, 1
    %p144 = por %p142, %p143
    %p145 = scmp.ne.s32.totalorder %s134, %s135
    %p146 = scmp.eq.s32.totalorder %s16, 0
    %p147 = por %p145, %p146
    %p148 = scmp.ne.s32.totalorder %s134, %s135
    %p149 = scmp.eq.s32.totalorder %s17, 1
    %p150 = por %p148, %p149
    %p152 = scmp.ne.s32.totalorder %s135, %s151
    %p153 = scmp.eq.s32.totalorder %s17, 0
    %p154 = por %p152, %p153
    %p155 = scmp.le.s32.totalorder 1, %s11
    %p156 = scmp.lt.s32.totalorder %s11, 3
    %p157 = pnand %p155, %p156
    %p158 = pneg %p157
    // Predicated region
    $region9: #{vime_forward.1} parent=5 // pred_check
      _
    $region10: #{vime_forward.1} parent=5 // pred_check_branch
      %160 = sbr.rel (%p157) target = $region12
    $region11: #{vime_forward.1} parent=5 // pred_region
      %s161 = ssub.s32 %s11, 1
      // Predicated region
      $region13: #{vime_forward.1} parent=11 // pred_check
        %p162 = pneg %p58
      $region14: #{vime_forward.1} parent=11 // pred_check_branch
        %164 = sbr.rel (%p162) target = $region16
      $region15: #{vime_forward.1} parent=11 // pred_region
        _
      $region16: #{vime_forward.1} parent=11 // pred_fallthru
        _
      // Predicated region
      $region17: #{vime_forward.1} parent=11 // pred_check
        %p165 = pneg %p79
      $region18: #{vime_forward.1} parent=11 // pred_check_branch
        %167 = sbr.rel (%p165) target = $region20
      $region19: #{vime_forward.1} parent=11 // pred_region
        _
      $region20: #{vime_forward.1} parent=11 // pred_fallthru
        _
      // Predicated region
      $region21: #{vime_forward.1} parent=11 // pred_check
        %p168 = pneg %p100
      $region22: #{vime_forward.1} parent=11 // pred_check_branch
        %170 = sbr.rel (%p168) target = $region24
      $region23: #{vime_forward.1} parent=11 // pred_region
        _
      $region24: #{vime_forward.1} parent=11 // pred_fallthru
        _
      // Predicated region
      $region25: #{vime_forward.1} parent=11 // pred_check
        %p171 = pneg %p121
      $region26: #{vime_forward.1} parent=11 // pred_check_branch
        %173 = sbr.rel (%p171) target = $region28
      $region27: #{vime_forward.1} parent=11 // pred_region
        _
      $region28: #{vime_forward.1} parent=11 // pred_fallthru
        _
    $region12: #{vime_forward.1} parent=5 // pred_fallthru
      _
    %p174 = scmp.lt.s32.totalorder %s11, 2
    // Predicated region
    $region29: #{vime_forward.1} parent=5 // pred_check
      %p175 = pneg %p174
    $region30: #{vime_forward.1} parent=5 // pred_check_branch
      %177 = sbr.rel (%p175) target = $region32
    $region31: #{vime_forward.1} parent=5 // pred_region
      // Predicated region
      $region33: #{vime_forward.1} parent=31 // pred_check
        %p178 = pneg %p31
      $region34: #{vime_forward.1} parent=31 // pred_check_branch
        %180 = sbr.rel (%p178) target = $region36
      $region35: #{vime_forward.1} parent=31 // pred_region
        %s181 = smul.u32 16, %s11
        %p182 = scmp.lt.s32.totalorder %s181, 31
        %s183 = scalar_select %p182, %s181, 31
        %s184 = smul.addr %s183, 4
        %s185 = scalar_lea.vmem %s0, %s184
        %s186 = smul.u32 16, %s11
      $region36: #{vime_forward.1} parent=31 // pred_fallthru
        _
    $region32: #{vime_forward.1} parent=5 // pred_fallthru
      _
    %p187 = scmp.le.s32.totalorder 1, %s11
    %p188 = scmp.lt.s32.totalorder %s11, 3
    %p189 = pnand %p187, %p188
    %p190 = pneg %p189
    // Predicated region
    $region37: #{vime_forward.1} parent=5 // pred_check
      _
    $region38: #{vime_forward.1} parent=5 // pred_check_branch
      %192 = sbr.rel (%p189) target = $region40
    $region39: #{vime_forward.1} parent=5 // pred_region
      %s193 = ssub.s32 %s11, 1
      %s194 = smul.u32 16, %s16
      %p195 = scmp.lt.s32.totalorder %s194, 31
      %s196 = scalar_select %p195, %s194, 31
      %s197 = smul.addr %s196, 4
      %s198 = scalar_lea.vmem %s0, %s197
      %p199 = pneg %p37
      %p200 = pneg %p34
      %p201 = pneg %p58
      %p202 = pneg %p55
      %p203 = pneg %p79
      %p204 = pneg %p76
      %p205 = pneg %p100
      %p206 = pneg %p97
      %p207 = pneg %p121
      %p208 = pneg %p118
      %p209 = pneg %p147
      %p210 = pneg %p144
      %s211 = smul.u32 16, %s16
      %p212 = scmp.lt.s32.totalorder %s211, 31
      %s213 = scalar_select %p212, %s211, 31
      %s214 = smul.addr %s213, 4
      %s215 = scalar_lea.vmem %s5, %s214
      %s216 = smul.u32 16, %s16
      %p217 = scmp.lt.s32.totalorder %s216, 31
      %s218 = scalar_select %p217, %s216, 31
      %s219 = smul.addr %s218, 4
      %s220 = scalar_lea.vmem %s0, %s219
      %s221 = smul.u32 16, %s16
      %s222 = smul.u32 16, %s16
      %p223 = scmp.lt.s32.totalorder %s222, 31
      %s224 = scalar_select %p223, %s222, 31
      %s225 = smul.addr %s224, 4
      %s226 = scalar_lea.vmem %s5, %s225
      %s227 = smul.u32 16, %s16
      %v229 = vld [vmem:[%s220] sm:$0xf]
      %v230 = vld [vmem:[%s220 + $0x4] sm:$0xf]
      %v231 = vld [vmem:[%s220 + $0x8] sm:$0xf]
      %v232 = vld [vmem:[%s220 + $0xc] sm:$0xf]
      %v233 = vld [vmem:[%s220 + $0x10] sm:$0xf]
      %v234 = vld [vmem:[%s220 + $0x14] sm:$0xf]
      %v235 = vld [vmem:[%s220 + $0x18] sm:$0xf]
      %v236 = vld [vmem:[%s220 + $0x1c] sm:$0xf]
      %v237 = vld [vmem:[%s220 + $0x20] sm:$0xf]
      %v238 = vld [vmem:[%s220 + $0x24] sm:$0xf]
      %v239 = vld [vmem:[%s220 + $0x28] sm:$0xf]
      %v240 = vld [vmem:[%s220 + $0x2c] sm:$0xf]
      %v241 = vld [vmem:[%s220 + $0x30] sm:$0xf]
      %v242 = vld [vmem:[%s220 + $0x34] sm:$0xf]
      %v243 = vld [vmem:[%s220 + $0x38] sm:$0xf]
      %v244 = vld [vmem:[%s220 + $0x3c] sm:$0xf]
      %v245 = vld [vmem:[%s1] sm:$0xf]
      %v246 = vld [vmem:[%s1 + $0x4] sm:$0xf]
      %v247 = vld [vmem:[%s1 + $0x8] sm:$0xf]
      %v248 = vld [vmem:[%s1 + $0xc] sm:$0xf]
      %v249 = vld [vmem:[%s1 + $0x10] sm:$0xf]
      %v250 = vld [vmem:[%s1 + $0x14] sm:$0xf]
      %v251 = vld [vmem:[%s1 + $0x18] sm:$0xf]
      %v252 = vld [vmem:[%s1 + $0x1c] sm:$0xf]
      %v253 = vld [vmem:[%s1 + $0x20] sm:$0xf]
      %v254 = vld [vmem:[%s1 + $0x24] sm:$0xf]
      %v255 = vld [vmem:[%s1 + $0x28] sm:$0xf]
      %v256 = vld [vmem:[%s1 + $0x2c] sm:$0xf]
      %v257 = vld [vmem:[%s1 + $0x30] sm:$0xf]
      %v258 = vld [vmem:[%s1 + $0x34] sm:$0xf]
      %v259 = vld [vmem:[%s1 + $0x38] sm:$0xf]
      %v260 = vld [vmem:[%s1 + $0x3c] sm:$0xf]
      %v261 = vld [vmem:[%s2] sm:$0x1]
      %v263 = vlaneseq
      %v264 = vshrl.u32 %v263, 7
      %v265 = vsub.s32 0, %v264
      %v266 = vrot.slane %v261, %v265
      %v284 = vunpack.c.l.b16 %v229
      %v285 = vunpack.c.l.b16 %v230
      %v286 = vunpack.c.l.b16 %v231
      %v287 = vunpack.c.l.b16 %v232
      %v288 = vunpack.c.l.b16 %v233
      %v289 = vunpack.c.l.b16 %v234
      %v290 = vunpack.c.l.b16 %v235
      %v291 = vunpack.c.l.b16 %v236
      %v292 = vunpack.c.l.b16 %v237
      %v293 = vunpack.c.l.b16 %v238
      %v294 = vunpack.c.l.b16 %v239
      %v295 = vunpack.c.l.b16 %v240
      %v296 = vunpack.c.l.b16 %v241
      %v297 = vunpack.c.l.b16 %v242
      %v298 = vunpack.c.l.b16 %v243
      %v299 = vunpack.c.l.b16 %v244
      %v300 = vpack.c.b16 %v285, %v284
      %v301 = vpack.c.b16 %v287, %v286
      %v302 = vpack.c.b16 %v289, %v288
      %v303 = vpack.c.b16 %v291, %v290
      %v304 = vpack.c.b16 %v293, %v292
      %v305 = vpack.c.b16 %v295, %v294
      %v306 = vpack.c.b16 %v297, %v296
      %v307 = vpack.c.b16 %v299, %v298
      %v332 = vunpack.c.l.b16 %v245
      %v333 = vunpack.c.l.b16 %v246
      %v334 = vunpack.c.l.b16 %v247
      %v335 = vunpack.c.l.b16 %v248
      %v336 = vunpack.c.l.b16 %v249
      %v337 = vunpack.c.l.b16 %v250
      %v338 = vunpack.c.l.b16 %v251
      %v339 = vunpack.c.l.b16 %v252
      %v340 = vunpack.c.l.b16 %v253
      %v341 = vunpack.c.l.b16 %v254
      %v342 = vunpack.c.l.b16 %v255
      %v343 = vunpack.c.l.b16 %v256
      %v344 = vunpack.c.l.b16 %v257
      %v345 = vunpack.c.l.b16 %v258
      %v346 = vunpack.c.l.b16 %v259
      %v347 = vunpack.c.l.b16 %v260
      %v348 = vpack.c.b16 %v333, %v332
      %v349 = vpack.c.b16 %v335, %v334
      %v350 = vpack.c.b16 %v337, %v336
      %v351 = vpack.c.b16 %v339, %v338
      %v352 = vpack.c.b16 %v341, %v340
      %v353 = vpack.c.b16 %v343, %v342
      %v354 = vpack.c.b16 %v345, %v344
      %v355 = vpack.c.b16 %v347, %v346
      %364 = vmatprep.subr.bf16.mxu0 0
      %365 = vmatpush1.bf16.msra.mxu0 %v348
      %366 = vmatprep.subr.bf16.mxu0 0
      %367 = vmatpush1.bf16.msra.mxu0 %v349
      %368 = vmatprep.subr.bf16.mxu0 0
      %369 = vmatpush1.bf16.msra.mxu0 %v350
      %370 = vmatprep.subr.bf16.mxu0 0
      %371 = vmatpush1.bf16.msra.mxu0 %v351
      %372 = vmatprep.subr.bf16.mxu0 0
      %373 = vmatpush1.bf16.msra.mxu0 %v352
      %374 = vmatprep.subr.bf16.mxu0 0
      %375 = vmatpush1.bf16.msra.mxu0 %v353
      %376 = vmatprep.subr.bf16.mxu0 0
      %377 = vmatpush1.bf16.msra.mxu0 %v354
      %378 = vmatprep.subr.bf16.mxu0 0
      %379 = vmatpush1.bf16.msra.mxu0 %v355
      %380 = vmatprep.subr.bf16.mxu0 0
      %381 = vmatpush1.bf16.msra.mxu0 0
      %382 = vmatprep.subr.bf16.mxu0 0
      %383 = vmatpush1.bf16.msra.mxu0 0
      %384 = vmatprep.subr.bf16.mxu0 0
      %385 = vmatpush1.bf16.msra.mxu0 0
      %386 = vmatprep.subr.bf16.mxu0 0
      %387 = vmatpush1.bf16.msra.mxu0 0
      %388 = vmatprep.subr.bf16.mxu0 0
      %389 = vmatpush1.bf16.msra.mxu0 0
      %390 = vmatprep.subr.bf16.mxu0 0
      %391 = vmatpush1.bf16.msra.mxu0 0
      %392 = vmatprep.subr.bf16.mxu0 0
      %393 = vmatpush1.bf16.msra.mxu0 0
      %394 = vmatprep.subr.bf16.mxu0 0
      %395 = vmatpush1.bf16.msra.mxu0 0
      %396 = vmatprep.mubr.bf16.mxu0 0
      %397 = vmatmul.mubr.bf16.gmra.mrb[0].mxu0 %v300
      %v398 = vpop.f32.mrb[0].mxu0
      %v399 = vadd.f32 %v266, %v398
      %v400 = vpop.f32.mrb[0].mxu0
      %v401 = vpop.f32.mrb[0].mxu0
      %v402 = vadd.f32 %v266, %v401
      %v403 = vpop.f32.mrb[0].mxu0
      %404 = vmatprep.mubr.bf16.mxu0 0
      %405 = vmatmul.mubr.bf16.gmra.mrb[0].mxu0 %v301
      %v406 = vpop.f32.mrb[0].mxu0
      %v407 = vadd.f32 %v266, %v406
      %v408 = vpop.f32.mrb[0].mxu0
      %v409 = vpop.f32.mrb[0].mxu0
      %v410 = vadd.f32 %v266, %v409
      %v411 = vpop.f32.mrb[0].mxu0
      %412 = vmatprep.mubr.bf16.mxu0 0
      %413 = vmatmul.mubr.bf16.gmra.mrb[0].mxu0 %v302
      %v414 = vpop.f32.mrb[0].mxu0
      %v415 = vadd.f32 %v266, %v414
      %v416 = vpop.f32.mrb[0].mxu0
      %v417 = vpop.f32.mrb[0].mxu0
      %v418 = vadd.f32 %v266, %v417
      %v419 = vpop.f32.mrb[0].mxu0
      %420 = vmatprep.mubr.bf16.mxu0 0
      %421 = vmatmul.mubr.bf16.gmra.mrb[0].mxu0 %v303
      %v422 = vpop.f32.mrb[0].mxu0
      %v423 = vadd.f32 %v266, %v422
      %v424 = vpop.f32.mrb[0].mxu0
      %v425 = vpop.f32.mrb[0].mxu0
      %v426 = vadd.f32 %v266, %v425
      %v427 = vpop.f32.mrb[0].mxu0
      %428 = vmatprep.mubr.bf16.mxu0 0
      %429 = vmatmul.mubr.bf16.gmra.mrb[0].mxu0 %v304
      %v430 = vpop.f32.mrb[0].mxu0
      %v431 = vadd.f32 %v266, %v430
      %v432 = vpop.f32.mrb[0].mxu0
      %v433 = vpop.f32.mrb[0].mxu0
      %v434 = vadd.f32 %v266, %v433
      %v435 = vpop.f32.mrb[0].mxu0
      %436 = vmatprep.mubr.bf16.mxu0 0
      %437 = vmatmul.mubr.bf16.gmra.mrb[0].mxu0 %v305
      %v438 = vpop.f32.mrb[0].mxu0
      %v439 = vadd.f32 %v266, %v438
      %v440 = vpop.f32.mrb[0].mxu0
      %v441 = vpop.f32.mrb[0].mxu0
      %v442 = vadd.f32 %v266, %v441
      %v443 = vpop.f32.mrb[0].mxu0
      %444 = vmatprep.mubr.bf16.mxu0 0
      %445 = vmatmul.mubr.bf16.gmra.mrb[0].mxu0 %v306
      %v446 = vpop.f32.mrb[0].mxu0
      %v447 = vadd.f32 %v266, %v446
      %v448 = vpop.f32.mrb[0].mxu0
      %v449 = vpop.f32.mrb[0].mxu0
      %v450 = vadd.f32 %v266, %v449
      %v451 = vpop.f32.mrb[0].mxu0
      %452 = vmatprep.mubr.bf16.mxu0 0
      %453 = vmatmul.mubr.bf16.gmra.mrb[0].mxu0 %v307
      %v454 = vpop.f32.mrb[0].mxu0
      %v455 = vadd.f32 %v266, %v454
      %v456 = vpop.f32.mrb[0].mxu0
      %v457 = vpop.f32.mrb[0].mxu0
      %v458 = vadd.f32 %v266, %v457
      %v459 = vpop.f32.mrb[0].mxu0
      %460 = vdwg.mxu0
      %v461 = vmax.f32 %v399, 0.0
      %v462 = vmax.f32 %v402, 0.0
      %v463 = vmax.f32 %v407, 0.0
      %v464 = vmax.f32 %v410, 0.0
      %v465 = vmax.f32 %v415, 0.0
      %v466 = vmax.f32 %v418, 0.0
      %v467 = vmax.f32 %v423, 0.0
      %v468 = vmax.f32 %v426, 0.0
      %v469 = vmax.f32 %v431, 0.0
      %v470 = vmax.f32 %v434, 0.0
      %v471 = vmax.f32 %v439, 0.0
      %v472 = vmax.f32 %v442, 0.0
      %v473 = vmax.f32 %v447, 0.0
      %v474 = vmax.f32 %v450, 0.0
      %v475 = vmax.f32 %v455, 0.0
      %v476 = vmax.f32 %v458, 0.0
      %v477 = vpack.c.bf16 %v462, %v461
      %v478 = vpack.c.bf16 %v464, %v463
      %v479 = vpack.c.bf16 %v466, %v465
      %v480 = vpack.c.bf16 %v468, %v467
      %v481 = vpack.c.bf16 %v470, %v469
      %v482 = vpack.c.bf16 %v472, %v471
      %v483 = vpack.c.bf16 %v474, %v473
      %v484 = vpack.c.bf16 %v476, %v475
      %v485 = vld [vmem:[%s3] sm:$0xf]
      %v486 = vld [vmem:[%s3 + $0x4] sm:$0xf]
      %v487 = vld [vmem:[%s3 + $0x8] sm:$0xf]
      %v488 = vld [vmem:[%s3 + $0xc] sm:$0xf]
      %v489 = vld [vmem:[%s3 + $0x10] sm:$0xf]
      %v490 = vld [vmem:[%s3 + $0x14] sm:$0xf]
      %v491 = vld [vmem:[%s3 + $0x18] sm:$0xf]
      %v492 = vld [vmem:[%s3 + $0x1c] sm:$0xf]
      %v493 = vld [vmem:[%s3 + $0x20] sm:$0xf]
      %v494 = vld [vmem:[%s3 + $0x24] sm:$0xf]
      %v495 = vld [vmem:[%s3 + $0x28] sm:$0xf]
      %v496 = vld [vmem:[%s3 + $0x2c] sm:$0xf]
      %v497 = vld [vmem:[%s3 + $0x30] sm:$0xf]
      %v498 = vld [vmem:[%s3 + $0x34] sm:$0xf]
      %v499 = vld [vmem:[%s3 + $0x38] sm:$0xf]
      %v500 = vld [vmem:[%s3 + $0x3c] sm:$0xf]
      %v501 = vld [vmem:[%s4] sm:$0x1]
      %v503 = vlaneseq
      %v504 = vshrl.u32 %v503, 7
      %v505 = vsub.s32 0, %v504
      %v506 = vrot.slane %v501, %v505
      %v524 = vunpack.c.l.b16 %v485
      %v525 = vunpack.c.l.b16 %v486
      %v526 = vunpack.c.l.b16 %v487
      %v527 = vunpack.c.l.b16 %v488
      %v528 = vunpack.c.l.b16 %v489
      %v529 = vunpack.c.l.b16 %v490
      %v530 = vunpack.c.l.b16 %v491
      %v531 = vunpack.c.l.b16 %v492
      %v532 = vunpack.c.l.b16 %v493
      %v533 = vunpack.c.l.b16 %v494
      %v534 = vunpack.c.l.b16 %v495
      %v535 = vunpack.c.l.b16 %v496
      %v536 = vunpack.c.l.b16 %v497
      %v537 = vunpack.c.l.b16 %v498
      %v538 = vunpack.c.l.b16 %v499
      %v539 = vunpack.c.l.b16 %v500
      %v540 = vpack.c.b16 %v525, %v524
      %v541 = vpack.c.b16 %v527, %v526
      %v542 = vpack.c.b16 %v529, %v528
      %v543 = vpack.c.b16 %v531, %v530
      %v544 = vpack.c.b16 %v533, %v532
      %v545 = vpack.c.b16 %v535, %v534
      %v546 = vpack.c.b16 %v537, %v536
      %v547 = vpack.c.b16 %v539, %v538
      %556 = vmatprep.subr.bf16.mxu0 0
      %557 = vmatpush1.bf16.msra.mxu0 %v540
      %558 = vmatprep.subr.bf16.mxu0 0
      %559 = vmatpush1.bf16.msra.mxu0 %v541
      %560 = vmatprep.subr.bf16.mxu0 0
      %561 = vmatpush1.bf16.msra.mxu0 %v542
      %562 = vmatprep.subr.bf16.mxu0 0
      %563 = vmatpush1.bf16.msra.mxu0 %v543
      %564 = vmatprep.subr.bf16.mxu0 0
      %565 = vmatpush1.bf16.msra.mxu0 %v544
      %566 = vmatprep.subr.bf16.mxu0 0
      %567 = vmatpush1.bf16.msra.mxu0 %v545
      %568 = vmatprep.subr.bf16.mxu0 0
      %569 = vmatpush1.bf16.msra.mxu0 %v546
      %570 = vmatprep.subr.bf16.mxu0 0
      %571 = vmatpush1.bf16.msra.mxu0 %v547
      %572 = vmatprep.subr.bf16.mxu0 0
      %573 = vmatpush1.bf16.msra.mxu0 0
      %574 = vmatprep.subr.bf16.mxu0 0
      %575 = vmatpush1.bf16.msra.mxu0 0
      %576 = vmatprep.subr.bf16.mxu0 0
      %577 = vmatpush1.bf16.msra.mxu0 0
      %578 = vmatprep.subr.bf16.mxu0 0
      %579 = vmatpush1.bf16.msra.mxu0 0
      %580 = vmatprep.subr.bf16.mxu0 0
      %581 = vmatpush1.bf16.msra.mxu0 0
      %582 = vmatprep.subr.bf16.mxu0 0
      %583 = vmatpush1.bf16.msra.mxu0 0
      %584 = vmatprep.subr.bf16.mxu0 0
      %585 = vmatpush1.bf16.msra.mxu0 0
      %586 = vmatprep.subr.bf16.mxu0 0
      %587 = vmatpush1.bf16.msra.mxu0 0
      %588 = vmatprep.mubr.bf16.mxu0 0
      %589 = vmatmul.mubr.bf16.gmra.mrb[0].mxu0 %v477
      %v590 = vpop.f32.mrb[0].mxu0
      %v591 = vadd.f32 %v506, %v590
      %v592 = vpop.f32.mrb[0].mxu0
      %v593 = vpop.f32.mrb[0].mxu0
      %v594 = vadd.f32 %v506, %v593
      %v595 = vpop.f32.mrb[0].mxu0
      %596 = vmatprep.mubr.bf16.mxu0 0
      %597 = vmatmul.mubr.bf16.gmra.mrb[0].mxu0 %v478
      %v598 = vpop.f32.mrb[0].mxu0
      %v599 = vadd.f32 %v506, %v598
      %v600 = vpop.f32.mrb[0].mxu0
      %v601 = vpop.f32.mrb[0].mxu0
      %v602 = vadd.f32 %v506, %v601
      %v603 = vpop.f32.mrb[0].mxu0
      %604 = vmatprep.mubr.bf16.mxu0 0
      %605 = vmatmul.mubr.bf16.gmra.mrb[0].mxu0 %v479
      %v606 = vpop.f32.mrb[0].mxu0
      %v607 = vadd.f32 %v506, %v606
      %v608 = vpop.f32.mrb[0].mxu0
      %v609 = vpop.f32.mrb[0].mxu0
      %v610 = vadd.f32 %v506, %v609
      %v611 = vpop.f32.mrb[0].mxu0
      %612 = vmatprep.mubr.bf16.mxu0 0
      %613 = vmatmul.mubr.bf16.gmra.mrb[0].mxu0 %v480
      %v614 = vpop.f32.mrb[0].mxu0
      %v615 = vadd.f32 %v506, %v614
      %v616 = vpop.f32.mrb[0].mxu0
      %v617 = vpop.f32.mrb[0].mxu0
      %v618 = vadd.f32 %v506, %v617
      %v619 = vpop.f32.mrb[0].mxu0
      %620 = vmatprep.mubr.bf16.mxu0 0
      %621 = vmatmul.mubr.bf16.gmra.mrb[0].mxu0 %v481
      %v622 = vpop.f32.mrb[0].mxu0
      %v623 = vadd.f32 %v506, %v622
      %v624 = vpop.f32.mrb[0].mxu0
      %v625 = vpop.f32.mrb[0].mxu0
      %v626 = vadd.f32 %v506, %v625
      %v627 = vpop.f32.mrb[0].mxu0
      %628 = vmatprep.mubr.bf16.mxu0 0
      %629 = vmatmul.mubr.bf16.gmra.mrb[0].mxu0 %v482
      %v630 = vpop.f32.mrb[0].mxu0
      %v631 = vadd.f32 %v506, %v630
      %v632 = vpop.f32.mrb[0].mxu0
      %v633 = vpop.f32.mrb[0].mxu0
      %v634 = vadd.f32 %v506, %v633
      %v635 = vpop.f32.mrb[0].mxu0
      %636 = vmatprep.mubr.bf16.mxu0 0
      %637 = vmatmul.mubr.bf16.gmra.mrb[0].mxu0 %v483
      %v638 = vpop.f32.mrb[0].mxu0
      %v639 = vadd.f32 %v506, %v638
      %v640 = vpop.f32.mrb[0].mxu0
      %v641 = vpop.f32.mrb[0].mxu0
      %v642 = vadd.f32 %v506, %v641
      %v643 = vpop.f32.mrb[0].mxu0
      %644 = vmatprep.mubr.bf16.mxu0 0
      %645 = vmatmul.mubr.bf16.gmra.mrb[0].mxu0 %v484
      %v646 = vpop.f32.mrb[0].mxu0
      %v647 = vadd.f32 %v506, %v646
      %v648 = vpop.f32.mrb[0].mxu0
      %v649 = vpop.f32.mrb[0].mxu0
      %v650 = vadd.f32 %v506, %v649
      %v651 = vpop.f32.mrb[0].mxu0
      %652 = vdwg.mxu0
      %v653 = vxor.u32 %v591, 2147483648
      %v654 = vxor.u32 %v594, 2147483648
      %v655 = vxor.u32 %v599, 2147483648
      %v656 = vxor.u32 %v602, 2147483648
      %v657 = vxor.u32 %v607, 2147483648
      %v658 = vxor.u32 %v610, 2147483648
      %v659 = vxor.u32 %v615, 2147483648
      %v660 = vxor.u32 %v618, 2147483648
      %v661 = vxor.u32 %v623, 2147483648
      %v662 = vxor.u32 %v626, 2147483648
      %v663 = vxor.u32 %v631, 2147483648
      %v664 = vxor.u32 %v634, 2147483648
      %v665 = vxor.u32 %v639, 2147483648
      %v666 = vxor.u32 %v642, 2147483648
      %v667 = vxor.u32 %v647, 2147483648
      %v668 = vxor.u32 %v650, 2147483648
      %v669 = vmul.f32 %v653, 1.442695
      %v670 = vpow.pop %v669
      %v671 = vmul.f32 %v654, 1.442695
      %v672 = vpow.pop %v671
      %v673 = vmul.f32 %v655, 1.442695
      %v674 = vpow.pop %v673
      %v675 = vmul.f32 %v656, 1.442695
      %v676 = vpow.pop %v675
      %v677 = vmul.f32 %v657, 1.442695
      %v678 = vpow.pop %v677
      %v679 = vmul.f32 %v658, 1.442695
      %v680 = vpow.pop %v679
      %v681 = vmul.f32 %v659, 1.442695
      %v682 = vpow.pop %v681
      %v683 = vmul.f32 %v660, 1.442695
      %v684 = vpow.pop %v683
      %v685 = vmul.f32 %v661, 1.442695
      %v686 = vpow.pop %v685
      %v687 = vmul.f32 %v662, 1.442695
      %v688 = vpow.pop %v687
      %v689 = vmul.f32 %v663, 1.442695
      %v690 = vpow.pop %v689
      %v691 = vmul.f32 %v664, 1.442695
      %v692 = vpow.pop %v691
      %v693 = vmul.f32 %v665, 1.442695
      %v694 = vpow.pop %v693
      %v695 = vmul.f32 %v666, 1.442695
      %v696 = vpow.pop %v695
      %v697 = vmul.f32 %v667, 1.442695
      %v698 = vpow.pop %v697
      %v699 = vmul.f32 %v668, 1.442695
      %v700 = vpow.pop %v699
      %v701 = vadd.f32 %v670, 1.0
      %v702 = vadd.f32 %v672, 1.0
      %v703 = vadd.f32 %v674, 1.0
      %v704 = vadd.f32 %v676, 1.0
      %v705 = vadd.f32 %v678, 1.0
      %v706 = vadd.f32 %v680, 1.0
      %v707 = vadd.f32 %v682, 1.0
      %v708 = vadd.f32 %v684, 1.0
      %v709 = vadd.f32 %v686, 1.0
      %v710 = vadd.f32 %v688, 1.0
      %v711 = vadd.f32 %v690, 1.0
      %v712 = vadd.f32 %v692, 1.0
      %v713 = vadd.f32 %v694, 1.0
      %v714 = vadd.f32 %v696, 1.0
      %v715 = vadd.f32 %v698, 1.0
      %v716 = vadd.f32 %v700, 1.0
      %v717 = vrcp.pop %v701
      %v718 = vmul.f32 1.0, %v717
      %v719 = vrcp.pop %v702
      %v720 = vmul.f32 1.0, %v719
      %v721 = vrcp.pop %v703
      %v722 = vmul.f32 1.0, %v721
      %v723 = vrcp.pop %v704
      %v724 = vmul.f32 1.0, %v723
      %v725 = vrcp.pop %v705
      %v726 = vmul.f32 1.0, %v725
      %v727 = vrcp.pop %v706
      %v728 = vmul.f32 1.0, %v727
      %v729 = vrcp.pop %v707
      %v730 = vmul.f32 1.0, %v729
      %v731 = vrcp.pop %v708
      %v732 = vmul.f32 1.0, %v731
      %v733 = vrcp.pop %v709
      %v734 = vmul.f32 1.0, %v733
      %v735 = vrcp.pop %v710
      %v736 = vmul.f32 1.0, %v735
      %v737 = vrcp.pop %v711
      %v738 = vmul.f32 1.0, %v737
      %v739 = vrcp.pop %v712
      %v740 = vmul.f32 1.0, %v739
      %v741 = vrcp.pop %v713
      %v742 = vmul.f32 1.0, %v741
      %v743 = vrcp.pop %v714
      %v744 = vmul.f32 1.0, %v743
      %v745 = vrcp.pop %v715
      %v746 = vmul.f32 1.0, %v745
      %v747 = vrcp.pop %v716
      %v748 = vmul.f32 1.0, %v747
      %v749 = vpack.c.bf16 %v720, %v718
      %v750 = vpack.c.bf16 %v724, %v722
      %v751 = vpack.c.bf16 %v728, %v726
      %v752 = vpack.c.bf16 %v732, %v730
      %v753 = vpack.c.bf16 %v736, %v734
      %v754 = vpack.c.bf16 %v740, %v738
      %v755 = vpack.c.bf16 %v744, %v742
      %v756 = vpack.c.bf16 %v748, %v746
      %v765 = vunpack.c.l.b16 %v749
      %v766 = vunpack.c.h.b16 %v749
      %v767 = vunpack.c.l.b16 %v750
      %v768 = vunpack.c.h.b16 %v750
      %v769 = vunpack.c.l.b16 %v751
      %v770 = vunpack.c.h.b16 %v751
      %v771 = vunpack.c.l.b16 %v752
      %v772 = vunpack.c.h.b16 %v752
      %v773 = vunpack.c.l.b16 %v753
      %v774 = vunpack.c.h.b16 %v753
      %v775 = vunpack.c.l.b16 %v754
      %v776 = vunpack.c.h.b16 %v754
      %v777 = vunpack.c.l.b16 %v755
      %v778 = vunpack.c.h.b16 %v755
      %v779 = vunpack.c.l.b16 %v756
      %v780 = vunpack.c.h.b16 %v756
      %v781 = vpack.c.b16 %v765, %v765
      %v782 = vpack.c.b16 %v766, %v766
      %v783 = vpack.c.b16 %v767, %v767
      %v784 = vpack.c.b16 %v768, %v768
      %v785 = vpack.c.b16 %v769, %v769
      %v786 = vpack.c.b16 %v770, %v770
      %v787 = vpack.c.b16 %v771, %v771
      %v788 = vpack.c.b16 %v772, %v772
      %v789 = vpack.c.b16 %v773, %v773
      %v790 = vpack.c.b16 %v774, %v774
      %v791 = vpack.c.b16 %v775, %v775
      %v792 = vpack.c.b16 %v776, %v776
      %v793 = vpack.c.b16 %v777, %v777
      %v794 = vpack.c.b16 %v778, %v778
      %v795 = vpack.c.b16 %v779, %v779
      %v796 = vpack.c.b16 %v780, %v780
      %813 = vst [vmem:[%s226] sm:$0xf] %v781
      %814 = vst [vmem:[%s226 + $0x4] sm:$0xf] %v782
      %815 = vst [vmem:[%s226 + $0x8] sm:$0xf] %v783
      %816 = vst [vmem:[%s226 + $0xc] sm:$0xf] %v784
      %817 = vst [vmem:[%s226 + $0x10] sm:$0xf] %v785
      %818 = vst [vmem:[%s226 + $0x14] sm:$0xf] %v786
      %819 = vst [vmem:[%s226 + $0x18] sm:$0xf] %v787
      %820 = vst [vmem:[%s226 + $0x1c] sm:$0xf] %v788
      %821 = vst [vmem:[%s226 + $0x20] sm:$0xf] %v789
      %822 = vst [vmem:[%s226 + $0x24] sm:$0xf] %v790
      %823 = vst [vmem:[%s226 + $0x28] sm:$0xf] %v791
      %824 = vst [vmem:[%s226 + $0x2c] sm:$0xf] %v792
      %825 = vst [vmem:[%s226 + $0x30] sm:$0xf] %v793
      %826 = vst [vmem:[%s226 + $0x34] sm:$0xf] %v794
      %827 = vst [vmem:[%s226 + $0x38] sm:$0xf] %v795
      %828 = vst [vmem:[%s226 + $0x3c] sm:$0xf] %v796
      %s829 = smul.u32 16, %s16
      %p830 = scmp.lt.s32.totalorder %s829, 31
      %s831 = scalar_select %p830, %s829, 31
      %s832 = smul.addr %s831, 4
      %s833 = scalar_lea.vmem %s5, %s832
      // Predicated region
      $region41: #{vime_forward.1} parent=39 // pred_check
        %p834 = pneg %p144
      $region42: #{vime_forward.1} parent=39 // pred_check_branch
        %836 = sbr.rel (%p834) target = $region44
      $region43: #{vime_forward.1} parent=39 // pred_region
        %s837 = smul.u32 16, %s16
      $region44: #{vime_forward.1} parent=39 // pred_fallthru
        _
    $region40: #{vime_forward.1} parent=5 // pred_fallthru
      _
    %p838 = scmp.le.s32.totalorder 2, %s11
    // Predicated region
    $region45: #{vime_forward.1} parent=5 // pred_check
      %p839 = pneg %p838
    $region46: #{vime_forward.1} parent=5 // pred_check_branch
      %841 = sbr.rel (%p839) target = $region48
    $region47: #{vime_forward.1} parent=5 // pred_region
      %s842 = ssub.s32 %s11, 2
      // Predicated region
      $region49: #{vime_forward.1} parent=47 // pred_check
        %p843 = pneg %p150
      $region50: #{vime_forward.1} parent=47 // pred_check_branch
        %845 = sbr.rel (%p843) target = $region52
      $region51: #{vime_forward.1} parent=47 // pred_region
        %s846 = smul.u32 16, %s17
        %p847 = scmp.lt.s32.totalorder %s846, 31
        %s848 = scalar_select %p847, %s846, 31
        %s849 = smul.addr %s848, 4
        %s850 = scalar_lea.vmem %s5, %s849
      $region52: #{vime_forward.1} parent=47 // pred_fallthru
        _
    $region48: #{vime_forward.1} parent=5 // pred_fallthru
      _
  $region6: #{vime_forward.1} parent=0 // loop_footer
    %s15 = sadd.s32 1, %s11
  $region7: #{vime_forward.1} parent=0 // loop_footer_branch
    %10 = sbr.rel target = $region3
  $region8: #{vime_forward.1} parent=0 // loop_exit
    _

</llo_original>
